<compile_context>
chip_gen: v5e
topology: v5e:2x2
jax: 0.10.0
libtpu: 0.0.40
codegen_flags: <defaults>
</compile_context>

<pallas_src>
import functools

import numpy as np
import jax
import jax.numpy as jnp
from jax import lax
from jax.experimental import pallas as pl
from jax.experimental.pallas import tpu as pltpu


# ----------------------------------------------------------------------------
# Pallas kernels
# ----------------------------------------------------------------------------
def _permute_kernel(x_ref, o_ref):
    # (Bn, F, HW) -> (Bn, HW, F): single batched minor-dims transpose (XLU).
    o_ref[...] = jnp.swapaxes(x_ref[...], 1, 2)


def _conv_stack_kernel(x_ref,
                       w1_ref, b1_ref, w2_ref, b2_ref, w3_ref, b3_ref,
                       w4_ref, b4_ref, w5_ref, b5_ref,
                       out_ref, *, H, W):
    """Fused Conv1x1-ReLU-Conv(3,5)-ReLU-Conv(3,5)-ReLU-Conv(3,4)-ReLU-Conv1x1-
    ReLU for a block of Bn images, channels-last end to end.

      x_ref      : (Bn, H*W, Cin)  bfloat16   (channels-last, lane-dense Cin)
      w2/w3/w4   : (kh, kw*C, Co)  bfloat16   (kw taps fused into K)
      b*_ref     : (1, Co)         float32
      out_ref    : (Bn, P, Ch)     float32    (lane-dense Ch; NCHW permute done
                                               by the wrapper)
    """
    Bn, HW, Cin = x_ref.shape
    Ch = w1_ref.shape[-1]

    # --- conv1: 1x1 conv == pure channel matmul; bias+ReLU fused, act -> bf16
    x2d = x_ref[...].reshape(Bn * HW, Cin)
    acc1 = jnp.dot(x2d, w1_ref[...], preferred_element_type=jnp.float32)
    y = jnp.maximum(acc1 + b1_ref[...], 0.0).astype(jnp.bfloat16)  # (Bn*HW, Ch)

    # --- VALID conv as kh matmuls with K = kw*C (taps fused), bias+ReLU fused
    def conv_relu(y2d, Hi, Wi, w_ref, b_ref):
        kh = w_ref.shape[0]
        C = y2d.shape[-1]
        kw = w_ref.shape[1] // C
        Ho, Wo = Hi - kh + 1, Wi - kw + 1
        x4 = y2d.reshape(Bn, Hi, Wi, C)
        acc = None
        for di in range(kh):
            # width window: kw channel-shifted slices concatenated on the lane
            # dim -> one matmul with K = kw*C per row offset.
            window = jnp.concatenate(
                [x4[:, di:di + Ho, dj:dj + Wo, :] for dj in range(kw)],
                axis=-1)
            patch = window.reshape(Bn * Ho * Wo, kw * C)
            term = jnp.dot(patch, w_ref[di],
                           preferred_element_type=jnp.float32)
            acc = term if acc is None else acc + term
        out = jnp.maximum(acc + b_ref[...], 0.0).astype(jnp.bfloat16)
        return out, Ho, Wo                                  # (Bn*Ho*Wo, Co) bf16

    y, H2, W2 = conv_relu(y, H, W, w2_ref, b2_ref)      # (3, 5)
    y, H3, W3 = conv_relu(y, H2, W2, w3_ref, b3_ref)    # (3, 5)
    y, H4, W4 = conv_relu(y, H3, W3, w4_ref, b4_ref)    # (3, 4)

    # --- conv5: 1x1 + ReLU; keep channels-last so stores stay lane-dense -----
    z = jnp.dot(y, w5_ref[...], preferred_element_type=jnp.float32)
    z = jnp.maximum(z + b5_ref[...], 0.0)                       # (Bn*P, Ch) f32
    out_ref[...] = z.reshape(Bn, H4 * W4, Ch).astype(out_ref.dtype)


# ----------------------------------------------------------------------------
# Hardware-aware sizing helpers
# ----------------------------------------------------------------------------
def _vmem_capacity_bytes():
    try:
        return int(pltpu.get_tpu_info().vmem_capacity_bytes)
    except Exception:
        return 128 * 1024 * 1024  # v5e/v6e default


# ----------------------------------------------------------------------------
# pallas_call wrappers
# ----------------------------------------------------------------------------
def flatten_permute(x_flat, *, block_n=None):
    # x_flat: (N, F, HW) -> (N, HW, F)   (preserve_spatial path, pure movement)
    N, F, HW = x_flat.shape
    if block_n is None:
        # target a multi-MiB block so this mem-bound copy sits near HBM roofline
        block_n = min(256, max(1, (4 << 20) // max(1, F * HW * x_flat.dtype.itemsize)))
    Bn = max(1, min(block_n, N))
    n_blocks = pl.cdiv(N, Bn)
    N_pad = n_blocks * Bn
    x = x_flat
    if N_pad != N:
        x = jnp.concatenate([x, jnp.zeros((N_pad - N, F, HW), x.dtype)], axis=0)
    y = pl.pallas_call(
        _permute_kernel,
        out_shape=jax.ShapeDtypeStruct((N_pad, HW, F), x.dtype),
        grid=(n_blocks,),
        in_specs=[pl.BlockSpec((Bn, F, HW), lambda n: (n, 0, 0))],
        out_specs=pl.BlockSpec((Bn, HW, F), lambda n: (n, 0, 0)),
        compiler_params=pltpu.CompilerParams(
            dimension_semantics=("parallel",)),
    )(x)
    return y[:N]


def conv_stack(x_nchw, params, *, block_n=None):
    """x_nchw: (N, Cin, H, W) -> (N, h_dim, H4*W4) float32 (fused conv stack)."""
    N, Cin, H, W = x_nchw.shape
    w1, b1, w2, b2, w3, b3, w4, b4, w5, b5 = params
    Ch = w1.shape[-1]
    H2, W2 = H - 2, W - 4          # after conv (3,5)
    H3, W3 = H2 - 2, W2 - 4        # after conv (3,5)
    H4, W4 = H3 - 2, W3 - 3        # after conv (3,4)
    P = H4 * W4

    # --- chip-dependent VMEM budget & batch block size ------------------------
    vmem_cap = _vmem_capacity_bytes()
    # ~40 MiB scoped limit on 64-MiB-VMEM chips (v7x-class), 64 MiB on v5e/v6e.
    vmem_limit = int(min(64 << 20, (vmem_cap * 5) // 8))

    weight_bytes = sum(int(np.prod(p.shape)) * p.dtype.itemsize for p in params)
    # rough static per-image footprint: double-buffered in/out blocks plus the
    # largest live in-kernel intermediates (conv1 act + widest im2col window).
    per_img = (2 * H * W * Cin * 2            # input block, bf16, 2x buffered
               + 2 * P * Ch * 4               # output block, f32, 2x buffered
               + H * W * Ch * 6               # conv1 f32 acc + bf16 act
               + 2 * H2 * W2 * 5 * Ch * 2     # window + patch copies (bf16)
               + 2 * H2 * W2 * Ch * 4)        # f32 term + accumulator
    budget = int(vmem_limit * 0.85) - weight_bytes
    bn_cap = 32 if vmem_cap >= (96 << 20) else 16
    if block_n is None:
        Bn = max(1, min(bn_cap, N, budget // max(per_img, 1)))
    else:
        Bn = max(1, min(block_n, N))
    if vmem_cap < (96 << 20) and N >= 2:
        # v7x-class chips have 2 TensorCores: make sure the "parallel" batch
        # axis has at least 2 blocks so both cores get work.
        Bn = min(Bn, -(-N // 2))
    n_blocks = pl.cdiv(N, Bn)
    N_pad = n_blocks * Bn

    # channels-last + bf16 in the wrapper (fuses into the surrounding XLA graph)
    x = jnp.transpose(x_nchw.reshape(N, Cin, H * W), (0, 2, 1)).astype(jnp.bfloat16)
    if N_pad != N:   # ragged tail: pad with zero images, slice result below
        x = jnp.concatenate(
            [x, jnp.zeros((N_pad - N, H * W, Cin), x.dtype)], axis=0)

    # fuse the kw taps of the spatial convs into the matmul K dimension
    w2f = w2.reshape(3, 5 * Ch, Ch)
    w3f = w3.reshape(3, 5 * Ch, Ch)
    w4f = w4.reshape(3, 4 * Ch, Ch)
    kparams = (w1, b1, w2f, b2, w3f, b3, w4f, b4, w5, b5)

    kernel = functools.partial(_conv_stack_kernel, H=H, W=W)

    flops = 2 * N_pad * Ch * (H * W * Cin
                              + 15 * H2 * W2 * Ch
                              + 15 * H3 * W3 * Ch
                              + 12 * P * Ch
                              + P * Ch)
    bytes_accessed = int(x.size * x.dtype.itemsize + weight_bytes
                         + N_pad * P * Ch * 4)
    cost = pl.CostEstimate(flops=int(flops), transcendentals=0,
                           bytes_accessed=bytes_accessed)

    # Weights/biases: whole-array, single-buffered VMEM residents -- their block
    # never changes across the grid, so there is nothing to pipeline.
    w_specs = [pl.BlockSpec(memory_space=pltpu.MemorySpace.VMEM)
               for _ in kparams]

    y = pl.pallas_call(
        kernel,
        out_shape=jax.ShapeDtypeStruct((N_pad, P, Ch), jnp.float32),
        grid=(n_blocks,),
        in_specs=[pl.BlockSpec((Bn, H * W, Cin), lambda n: (n, 0, 0))] + w_specs,
        out_specs=pl.BlockSpec((Bn, P, Ch), lambda n: (n, 0, 0)),
        compiler_params=pltpu.CompilerParams(
            dimension_semantics=("parallel",),
            vmem_limit_bytes=vmem_limit),
        cost_estimate=cost,
    )(x, *kparams)

    # lane-dense kernel output (N, P, Ch) -> module layout (N, Ch, P)
    return jnp.transpose(y[:N], (0, 2, 1))


# ----------------------------------------------------------------------------
# Module wrapper (matches PyTorch PostPreprocessor.forward semantics)
# ----------------------------------------------------------------------------
class PostPreprocessorPallas:
    def __init__(self, inp_dim, h_dim=384, preserve_spatial=True,
                 block_n=None, key=jax.random.PRNGKey(0)):
        self.preserve_spatial = preserve_spatial
        self.h_dim = h_dim
        self.block_n = block_n
        self.params = None
        if not preserve_spatial:
            ks = jax.random.split(key, 10)

            def w_init(k, shape, fan_in):
                return (jax.random.normal(k, shape, jnp.float32)
                        / np.sqrt(fan_in)).astype(jnp.bfloat16)

            def b_init(k, fan_in):
                return (jax.random.normal(k, (1, h_dim), jnp.float32)
                        / np.sqrt(fan_in)).astype(jnp.float32)

            # Weights HWIO-style (1x1 convs stored as plain (Cin, Cout)) in
            # bfloat16 (native MXU dtype); biases (1, h_dim) float32.
            self.params = (
                w_init(ks[0], (inp_dim, h_dim), inp_dim),            # conv1 1x1
                b_init(ks[1], inp_dim),
                w_init(ks[2], (3, 5, h_dim, h_dim), 3 * 5 * h_dim),  # conv2 (3,5)
                b_init(ks[3], h_dim),
                w_init(ks[4], (3, 5, h_dim, h_dim), 3 * 5 * h_dim),  # conv3 (3,5)
                b_init(ks[5], h_dim),
                w_init(ks[6], (3, 4, h_dim, h_dim), 3 * 4 * h_dim),  # conv4 (3,4)
                b_init(ks[7], h_dim),
                w_init(ks[8], (h_dim, h_dim), h_dim),                # conv5 1x1
                b_init(ks[9], h_dim),
            )

    def __call__(self, x):
        # x: (B, C, H, W) float32, or (B, T, C, H, W)
        t = 0
        if x.ndim > 4:
            b, t, f, h, w = x.shape
            x = x.reshape(b * t, f, h, w)
        N, F, H, W = x.shape

        if self.preserve_spatial:
            y = flatten_permute(x.reshape(N, F, H * W), block_n=self.block_n)
            if t != 0:
                y = y.reshape(b, t, H * W, F)
            return y

        y = conv_stack(x, self.params, block_n=self.block_n)   # (N, h_dim, P)
        if t != 0:
            y = y.reshape(b, t, -1)
        return y


# ----------------------------------------------------------------------------
# Pure-JAX reference (mirrors the PyTorch forward; kernel-matching precision)
# ----------------------------------------------------------------------------
def ref_forward(pp, x):
    t = 0
    if x.ndim > 4:
        b, t, f, h, w = x.shape
        x = x.reshape(b * t, f, h, w)
    N, F, H, W = x.shape

    if pp.preserve_spatial:
        y = jnp.transpose(x.reshape(N, F, H * W), (0, 2, 1))
        if t != 0:
            y = y.reshape(b, t, H * W, F)
        return y

    w1, b1, w2, b2, w3, b3, w4, b4, w5, b5 = pp.params

    def conv_relu(xin, w_hwio, bias):
        # mimic kernel precision: bf16 operands, f32 accumulation.
        xb = xin.astype(jnp.bfloat16).astype(jnp.float32)
        w_oihw = jnp.transpose(w_hwio.astype(jnp.float32), (3, 2, 0, 1))
        y = lax.conv_general_dilated(
            xb, w_oihw, (1, 1), "VALID",
            dimension_numbers=("NCHW", "OIHW", "NCHW"))
        return jnp.maximum(y + bias.reshape(1, -1, 1, 1), 0.0)

    y = conv_relu(x.astype(jnp.float32), w1.reshape(1, 1, *w1.shape), b1)
    y = conv_relu(y, w2, b2)
    y = conv_relu(y, w3, b3)
    y = conv_relu(y, w4, b4)
    y = conv_relu(y, w5.reshape(1, 1, *w5.shape), b5)
    y = y.reshape(y.shape[0], pp.h_dim, -1)
    if t != 0:
        y = y.reshape(b, t, -1)
    return y


# ----------------------------------------------------------------------------
if __name__ == "__main__":
    key = jax.random.PRNGKey(0)
    k1, k2, kp = jax.random.split(key, 3)

    # --- mode 1: preserve_spatial=True (default), 5D input (b, t, f, h, w) ---
    x5 = jax.random.normal(k1, (2, 3, 8, 4, 4), jnp.float32)
    pp_sp = PostPreprocessorPallas(inp_dim=8, h_dim=32, preserve_spatial=True)
    y_sp = jax.block_until_ready(pp_sp(x5))               # (2, 3, 16, 8)
    np.testing.assert_allclose(np.asarray(y_sp),
                               np.asarray(ref_forward(pp_sp, x5)),
                               rtol=1e-6, atol=1e-6)

    # --- mode 2: preserve_spatial=False, 4D NCHW input, fused conv stack -----
    x4 = jax.random.normal(k2, (2, 4, 9, 14), jnp.float32)
    pp_conv = PostPreprocessorPallas(inp_dim=4, h_dim=32,
                                     preserve_spatial=False, key=kp)
    y_conv = jax.block_until_ready(pp_conv(x4))           # (2, 32, 9)
    np.testing.assert_allclose(np.asarray(y_conv),
                               np.asarray(ref_forward(pp_conv, x4)),
                               rtol=2e-2, atol=2e-2)

    print("KERNEL_OK")
</pallas_src>

<mosaic_0001>
module attributes {stable_mosaic.version = 11 : i64} {
  func.func @_permute_kernel(%arg0: i32, %arg1: memref<6x8x16xf32, #tpu.memory_space<vmem>>, %arg2: memref<6x16x8xf32, #tpu.memory_space<vmem>>) attributes {dimension_semantics = [#tpu.dimension_semantics<parallel>], iteration_bounds = array<i64: 1>, scalar_prefetch = 0 : i64, scratch_operands = 0 : i64, tpu.core_type = #tpu.core_type<tc>, window_params = [{transform_indices = @transform_0, window_bounds = array<i64: 6, 8, 16>}, {transform_indices = @transform_1, window_bounds = array<i64: 6, 16, 8>}]} {
    %c0 = arith.constant 0 : index
    %c0_0 = arith.constant 0 : index
    %c0_1 = arith.constant 0 : index
    %0 = vector.load %arg1[%c0, %c0_0, %c0_1] : memref<6x8x16xf32, #tpu.memory_space<vmem>>, vector<6x8x16xf32>
    %1 = tpu.transpose %0, [0, 2, 1] : vector<6x8x16xf32> -> vector<6x16x8xf32>
    %c0_2 = arith.constant 0 : index
    %c0_3 = arith.constant 0 : index
    %c0_4 = arith.constant 0 : index
    %2 = vector.load %arg2[%c0_2, %c0_3, %c0_4] : memref<6x16x8xf32, #tpu.memory_space<vmem>>, vector<6x16x8xf32>
    tpu.vector_store %arg2[%c0_2, %c0_3, %c0_4], %1 {strides = array<i32>} : memref<6x16x8xf32, #tpu.memory_space<vmem>>, vector<6x16x8xf32>,
    return
  }
  func.func @transform_0(%arg0: i32) -> (i32, i32, i32) {
    %c0_i32 = arith.constant 0 : i32
    %c0_i32_0 = arith.constant 0 : i32
    %c0_i32_1 = arith.constant 0 : i32
    return %arg0, %c0_i32, %c0_i32_0 : i32, i32, i32
  }
  func.func @transform_1(%arg0: i32) -> (i32, i32, i32) {
    %c0_i32 = arith.constant 0 : i32
    %c0_i32_0 = arith.constant 0 : i32
    %c0_i32_1 = arith.constant 0 : i32
    return %arg0, %c0_i32, %c0_i32_0 : i32, i32, i32
  }
}

</mosaic_0001>

<llo_original>
// kernel: tpu_custom_call.1
$region0: #{tpu_custom_call.1}
  #allocation0 [shape = 'u32[]', space=smem, size = 0x4, offset = 0x4, fixed_abs, tag = 'smem constant byte address 0x4 - core index']
  #allocation1 [shape = 'u32[72,128]{1,0:T(1,128)}', space=vmem, size = 0x9000, scoped, tag = 'internal scratch']
  %s0 = inlined_call_operand.hbm [shape: f32[6,8,16], index: 0, kind: input, shape index: {}]
  %s1 = inlined_call_operand.vmem [shape: f32[6,16,8], index: 1, kind: output, shape index: {}]
  %s2 = sld [smem:[#allocation0]]
  $region18: #{tpu_custom_call.1} parent=0
    _
  %s4 = ssub.s32 1, %s2
  %s5 = scalar_select 0, %s4, %s2
  $region1: #{tpu_custom_call.1} parent=0
    #allocation2 [shape = 'u8[24576]{0}', space=vmem, size = 0x6000, scoped, tag = 'input window, operand 0, single buffered']
    #allocation3 [shape = 's32[1]{0}', space=sflag, size = 0x4, scoped, tag = 'scoped memory for tpu_custom_call.1']
    %6 = vsyncpa [#allocation3], 0
    // Predicated region
    $region2: #{tpu_custom_call.1} parent=1 // pred_check
      _
    $region3: #{tpu_custom_call.1} parent=1 // pred_check_branch
      %8 = sbr.rel (0) target = $region5
    $region4: #{tpu_custom_call.1} parent=1 // pred_region
      %10 = vsyncadd [#allocation3], 0
      %s11 = sshll.u32 %s0, 4
      %s12 = int_to_ptr.hbm [resolvable:$true] %s11
      %s13 = sshll.u32 [#allocation2], 4
      %s14 = int_to_ptr.vmem [resolvable:$true] %s13
      %19 = dma.hbm_to_vmem [thread:$0]  %s12, 768, %s14, [#allocation3], 128, 128, 8
    $region5: #{tpu_custom_call.1} parent=1 // pred_fallthru
      _
    // Predicated region
    $region6: #{tpu_custom_call.1} parent=1 // pred_check
      _
    $region7: #{tpu_custom_call.1} parent=1 // pred_check_branch
      %21 = sbr.rel (0) target = $region9
    $region8: #{tpu_custom_call.1} parent=1 // pred_region
      %23 = dma.done [#allocation3], 768
    $region9: #{tpu_custom_call.1} parent=1 // pred_fallthru
      _
    %v24 = vld [vmem:[#allocation2] sm:$0xff]
    %v25 = vld [vmem:[#allocation2 + $0x8] sm:$0xff]
    %v26 = vld [vmem:[#allocation2 + $0x10] sm:$0xff]
    %v27 = vld [vmem:[#allocation2 + $0x18] sm:$0xff]
    %v28 = vld [vmem:[#allocation2 + $0x20] sm:$0xff]
    %v29 = vld [vmem:[#allocation2 + $0x28] sm:$0xff]
    %30 = vxpose.xlu0.b32.start [1/16] %v24, 128
    %31 = vxpose.xlu0.b32.cont [2/16] 0.0, 128
    %32 = vxpose.xlu0.b32.cont [3/16] 0.0, 128
    %33 = vxpose.xlu0.b32.cont [4/16] 0.0, 128
    %34 = vxpose.xlu0.b32.cont [5/16] 0.0, 128
    %35 = vxpose.xlu0.b32.cont [6/16] 0.0, 128
    %36 = vxpose.xlu0.b32.cont [7/16] 0.0, 128
    %37 = vxpose.xlu0.b32.cont [8/16] 0.0, 128
    %38 = vxpose.xlu0.b32.cont [9/16] 0.0, 128
    %39 = vxpose.xlu0.b32.cont [10/16] 0.0, 128
    %40 = vxpose.xlu0.b32.cont [11/16] 0.0, 128
    %41 = vxpose.xlu0.b32.cont [12/16] 0.0, 128
    %42 = vxpose.xlu0.b32.cont [13/16] 0.0, 128
    %43 = vxpose.xlu0.b32.cont [14/16] 0.0, 128
    %44 = vxpose.xlu0.b32.cont [15/16] 0.0, 128
    %45 = vxpose.xlu0.b32.end [16/16] 0.0, 128
    %v46 = vpop.trf.xlu0
    %v47 = vpop.trf.xlu0
    %v48 = vpop.trf.xlu0
    %v49 = vpop.trf.xlu0
    %v50 = vpop.trf.xlu0
    %v51 = vpop.trf.xlu0
    %v52 = vpop.trf.xlu0
    %v53 = vpop.trf.xlu0
    %v54 = vpop.trf.xlu0
    %v55 = vpop.trf.xlu0
    %v56 = vpop.trf.xlu0
    %v57 = vpop.trf.xlu0
    %v58 = vpop.trf.xlu0
    %v59 = vpop.trf.xlu0
    %v60 = vpop.trf.xlu0
    %v61 = vpop.trf.xlu0
    %62 = vxpose.xlu0.b32.start [1/16] %v25, 128
    %63 = vxpose.xlu0.b32.cont [2/16] 0.0, 128
    %64 = vxpose.xlu0.b32.cont [3/16] 0.0, 128
    %65 = vxpose.xlu0.b32.cont [4/16] 0.0, 128
    %66 = vxpose.xlu0.b32.cont [5/16] 0.0, 128
    %67 = vxpose.xlu0.b32.cont [6/16] 0.0, 128
    %68 = vxpose.xlu0.b32.cont [7/16] 0.0, 128
    %69 = vxpose.xlu0.b32.cont [8/16] 0.0, 128
    %70 = vxpose.xlu0.b32.cont [9/16] 0.0, 128
    %71 = vxpose.xlu0.b32.cont [10/16] 0.0, 128
    %72 = vxpose.xlu0.b32.cont [11/16] 0.0, 128
    %73 = vxpose.xlu0.b32.cont [12/16] 0.0, 128
    %74 = vxpose.xlu0.b32.cont [13/16] 0.0, 128
    %75 = vxpose.xlu0.b32.cont [14/16] 0.0, 128
    %76 = vxpose.xlu0.b32.cont [15/16] 0.0, 128
    %77 = vxpose.xlu0.b32.end [16/16] 0.0, 128
    %v78 = vpop.trf.xlu0
    %v79 = vpop.trf.xlu0
    %v80 = vpop.trf.xlu0
    %v81 = vpop.trf.xlu0
    %v82 = vpop.trf.xlu0
    %v83 = vpop.trf.xlu0
    %v84 = vpop.trf.xlu0
    %v85 = vpop.trf.xlu0
    %v86 = vpop.trf.xlu0
    %v87 = vpop.trf.xlu0
    %v88 = vpop.trf.xlu0
    %v89 = vpop.trf.xlu0
    %v90 = vpop.trf.xlu0
    %v91 = vpop.trf.xlu0
    %v92 = vpop.trf.xlu0
    %v93 = vpop.trf.xlu0
    %94 = vxpose.xlu0.b32.start [1/16] %v26, 128
    %95 = vxpose.xlu0.b32.cont [2/16] 0.0, 128
    %96 = vxpose.xlu0.b32.cont [3/16] 0.0, 128
    %97 = vxpose.xlu0.b32.cont [4/16] 0.0, 128
    %98 = vxpose.xlu0.b32.cont [5/16] 0.0, 128
    %99 = vxpose.xlu0.b32.cont [6/16] 0.0, 128
    %100 = vxpose.xlu0.b32.cont [7/16] 0.0, 128
    %101 = vxpose.xlu0.b32.cont [8/16] 0.0, 128
    %102 = vxpose.xlu0.b32.cont [9/16] 0.0, 128
    %103 = vxpose.xlu0.b32.cont [10/16] 0.0, 128
    %104 = vxpose.xlu0.b32.cont [11/16] 0.0, 128
    %105 = vxpose.xlu0.b32.cont [12/16] 0.0, 128
    %106 = vxpose.xlu0.b32.cont [13/16] 0.0, 128
    %107 = vxpose.xlu0.b32.cont [14/16] 0.0, 128
    %108 = vxpose.xlu0.b32.cont [15/16] 0.0, 128
    %109 = vxpose.xlu0.b32.end [16/16] 0.0, 128
    %v110 = vpop.trf.xlu0
    %v111 = vpop.trf.xlu0
    %v112 = vpop.trf.xlu0
    %v113 = vpop.trf.xlu0
    %v114 = vpop.trf.xlu0
    %v115 = vpop.trf.xlu0
    %v116 = vpop.trf.xlu0
    %v117 = vpop.trf.xlu0
    %v118 = vpop.trf.xlu0
    %v119 = vpop.trf.xlu0
    %v120 = vpop.trf.xlu0
    %v121 = vpop.trf.xlu0
    %v122 = vpop.trf.xlu0
    %v123 = vpop.trf.xlu0
    %v124 = vpop.trf.xlu0
    %v125 = vpop.trf.xlu0
    %126 = vxpose.xlu0.b32.start [1/16] %v27, 128
    %127 = vxpose.xlu0.b32.cont [2/16] 0.0, 128
    %128 = vxpose.xlu0.b32.cont [3/16] 0.0, 128
    %129 = vxpose.xlu0.b32.cont [4/16] 0.0, 128
    %130 = vxpose.xlu0.b32.cont [5/16] 0.0, 128
    %131 = vxpose.xlu0.b32.cont [6/16] 0.0, 128
    %132 = vxpose.xlu0.b32.cont [7/16] 0.0, 128
    %133 = vxpose.xlu0.b32.cont [8/16] 0.0, 128
    %134 = vxpose.xlu0.b32.cont [9/16] 0.0, 128
    %135 = vxpose.xlu0.b32.cont [10/16] 0.0, 128
    %136 = vxpose.xlu0.b32.cont [11/16] 0.0, 128
    %137 = vxpose.xlu0.b32.cont [12/16] 0.0, 128
    %138 = vxpose.xlu0.b32.cont [13/16] 0.0, 128
    %139 = vxpose.xlu0.b32.cont [14/16] 0.0, 128
    %140 = vxpose.xlu0.b32.cont [15/16] 0.0, 128
    %141 = vxpose.xlu0.b32.end [16/16] 0.0, 128
    %v142 = vpop.trf.xlu0
    %v143 = vpop.trf.xlu0
    %v144 = vpop.trf.xlu0
    %v145 = vpop.trf.xlu0
    %v146 = vpop.trf.xlu0
    %v147 = vpop.trf.xlu0
    %v148 = vpop.trf.xlu0
    %v149 = vpop.trf.xlu0
    %v150 = vpop.trf.xlu0
    %v151 = vpop.trf.xlu0
    %v152 = vpop.trf.xlu0
    %v153 = vpop.trf.xlu0
    %v154 = vpop.trf.xlu0
    %v155 = vpop.trf.xlu0
    %v156 = vpop.trf.xlu0
    %v157 = vpop.trf.xlu0
    %158 = vxpose.xlu0.b32.start [1/16] %v28, 128
    %159 = vxpose.xlu0.b32.cont [2/16] 0.0, 128
    %160 = vxpose.xlu0.b32.cont [3/16] 0.0, 128
    %161 = vxpose.xlu0.b32.cont [4/16] 0.0, 128
    %162 = vxpose.xlu0.b32.cont [5/16] 0.0, 128
    %163 = vxpose.xlu0.b32.cont [6/16] 0.0, 128
    %164 = vxpose.xlu0.b32.cont [7/16] 0.0, 128
    %165 = vxpose.xlu0.b32.cont [8/16] 0.0, 128
    %166 = vxpose.xlu0.b32.cont [9/16] 0.0, 128
    %167 = vxpose.xlu0.b32.cont [10/16] 0.0, 128
    %168 = vxpose.xlu0.b32.cont [11/16] 0.0, 128
    %169 = vxpose.xlu0.b32.cont [12/16] 0.0, 128
    %170 = vxpose.xlu0.b32.cont [13/16] 0.0, 128
    %171 = vxpose.xlu0.b32.cont [14/16] 0.0, 128
    %172 = vxpose.xlu0.b32.cont [15/16] 0.0, 128
    %173 = vxpose.xlu0.b32.end [16/16] 0.0, 128
    %v174 = vpop.trf.xlu0
    %v175 = vpop.trf.xlu0
    %v176 = vpop.trf.xlu0
    %v177 = vpop.trf.xlu0
    %v178 = vpop.trf.xlu0
    %v179 = vpop.trf.xlu0
    %v180 = vpop.trf.xlu0
    %v181 = vpop.trf.xlu0
    %v182 = vpop.trf.xlu0
    %v183 = vpop.trf.xlu0
    %v184 = vpop.trf.xlu0
    %v185 = vpop.trf.xlu0
    %v186 = vpop.trf.xlu0
    %v187 = vpop.trf.xlu0
    %v188 = vpop.trf.xlu0
    %v189 = vpop.trf.xlu0
    %190 = vxpose.xlu0.b32.start [1/16] %v29, 128
    %191 = vxpose.xlu0.b32.cont [2/16] 0.0, 128
    %192 = vxpose.xlu0.b32.cont [3/16] 0.0, 128
    %193 = vxpose.xlu0.b32.cont [4/16] 0.0, 128
    %194 = vxpose.xlu0.b32.cont [5/16] 0.0, 128
    %195 = vxpose.xlu0.b32.cont [6/16] 0.0, 128
    %196 = vxpose.xlu0.b32.cont [7/16] 0.0, 128
    %197 = vxpose.xlu0.b32.cont [8/16] 0.0, 128
    %198 = vxpose.xlu0.b32.cont [9/16] 0.0, 128
    %199 = vxpose.xlu0.b32.cont [10/16] 0.0, 128
    %200 = vxpose.xlu0.b32.cont [11/16] 0.0, 128
    %201 = vxpose.xlu0.b32.cont [12/16] 0.0, 128
    %202 = vxpose.xlu0.b32.cont [13/16] 0.0, 128
    %203 = vxpose.xlu0.b32.cont [14/16] 0.0, 128
    %204 = vxpose.xlu0.b32.cont [15/16] 0.0, 128
    %205 = vxpose.xlu0.b32.end [16/16] 0.0, 128
    %v206 = vpop.trf.xlu0
    %v207 = vpop.trf.xlu0
    %v208 = vpop.trf.xlu0
    %v209 = vpop.trf.xlu0
    %v210 = vpop.trf.xlu0
    %v211 = vpop.trf.xlu0
    %v212 = vpop.trf.xlu0
    %v213 = vpop.trf.xlu0
    %v214 = vpop.trf.xlu0
    %v215 = vpop.trf.xlu0
    %v216 = vpop.trf.xlu0
    %v217 = vpop.trf.xlu0
    %v218 = vpop.trf.xlu0
    %v219 = vpop.trf.xlu0
    %v220 = vpop.trf.xlu0
    %v221 = vpop.trf.xlu0
    %vm222 = vcmask 64512
    %223 = vst.msk [vmem:[%s1] sm:$0xff] %vm222, %v46
    %224 = vst.msk [vmem:[%s1 + $0x8] sm:$0xff] %vm222, %v47
    %225 = vst.msk [vmem:[%s1 + $0x10] sm:$0xff] %vm222, %v78
    %226 = vst.msk [vmem:[%s1 + $0x18] sm:$0xff] %vm222, %v79
    %227 = vst.msk [vmem:[%s1 + $0x20] sm:$0xff] %vm222, %v110
    %228 = vst.msk [vmem:[%s1 + $0x28] sm:$0xff] %vm222, %v111
    %229 = vst.msk [vmem:[%s1 + $0x30] sm:$0xff] %vm222, %v142
    %230 = vst.msk [vmem:[%s1 + $0x38] sm:$0xff] %vm222, %v143
    %231 = vst.msk [vmem:[%s1 + $0x40] sm:$0xff] %vm222, %v174
    %232 = vst.msk [vmem:[%s1 + $0x48] sm:$0xff] %vm222, %v175
    %233 = vst.msk [vmem:[%s1 + $0x50] sm:$0xff] %vm222, %v206
    %234 = vst.msk [vmem:[%s1 + $0x58] sm:$0xff] %vm222, %v207
    // Predicated region
    $region10: #{tpu_custom_call.1} parent=1 // pred_check
      _
    $region11: #{tpu_custom_call.1} parent=1 // pred_check_branch
      %236 = sbr.rel (0) target = $region13
    $region12: #{tpu_custom_call.1} parent=1 // pred_region
      _
    $region13: #{tpu_custom_call.1} parent=1 // pred_fallthru
      _
    // Predicated region
    $region14: #{tpu_custom_call.1} parent=1 // pred_check
      _
    $region15: #{tpu_custom_call.1} parent=1 // pred_check_branch
      %238 = sbr.rel (0) target = $region17
    $region16: #{tpu_custom_call.1} parent=1 // pred_region
      _
    $region17: #{tpu_custom_call.1} parent=1 // pred_fallthru
      _
    %239 = vsyncpa [#allocation3], 1

</llo_original>
